<compile_context>
chip_gen: v5e
topology: v5e:2x2
jax: 0.10.0
libtpu: 0.0.40
codegen_flags: <defaults>
</compile_context>

<pallas_src>
import jax
import jax.numpy as jnp
from jax.experimental import pallas as pl
from jax.experimental.pallas import tpu as pltpu


def _gated_updater_kernel(alpha_ref, emb_ref, x_ref, o_ref):
    # alpha_ref : (T, 1)   emb_ref : (T, D)   x_ref : (T, D)   o_ref : (T, D)
    alpha = alpha_ref[...].astype(jnp.float32)
    emb = emb_ref[...].astype(jnp.float32)
    x = x_ref[...].astype(jnp.float32)
    # (1 - alpha) * emb + alpha * x  ==  emb + alpha * (x - emb)
    o_ref[...] = (emb + alpha * (x - emb)).astype(o_ref.dtype)


def _pick_tile_rows(n, d, itemsize, vmem_budget_bytes=24 << 20, bufs=6):
    """Largest legal row-tile whose buffered working set fits the VMEM budget.

    Legal tiles: multiple-of-8 divisors of n, or n itself (full-dim block).
    `bufs` ~ double-buffered x, out and emb tiles (alpha is negligible).
    """
    if n % 8 != 0:
        # No multiple-of-8 divisor can exist; only the full-dim block is legal.
        return n
    cap = max(8, (vmem_budget_bytes // (bufs * d * itemsize)) // 8 * 8)
    best = 8
    t = 8
    while t <= n:
        if n % t == 0 and t <= cap:
            best = t
        t += 8
    return best


def global_gated_updater(nodes_output, items_embedding, alpha):
    """nodes_output: (B*N, D); items_embedding: (N, D); alpha: (N, 1) -> (B, N, D)."""
    n, d = items_embedding.shape
    bn, d2 = nodes_output.shape
    assert d == d2 and bn % n == 0, "nodes_output must be (B*items_total, embed_dim)"
    b = bn // n
    itemsize = jnp.dtype(nodes_output.dtype).itemsize

    tile_rows = _pick_tile_rows(n, d, itemsize)
    blocks_per_batch = n // tile_rows

    x3 = nodes_output.reshape(b, n, d)  # free metadata reshape (wrapper glue)

    return pl.pallas_call(
        _gated_updater_kernel,
        out_shape=jax.ShapeDtypeStruct((b, n, d), nodes_output.dtype),
        grid_spec=pltpu.PrefetchScalarGridSpec(
            num_scalar_prefetch=0,
            # Row-block axis OUTER, batch axis INNER: alpha/emb block indices
            # are constant across the inner axis -> fetched from HBM once.
            grid=(blocks_per_batch, b),
            in_specs=[
                pl.BlockSpec((tile_rows, 1), lambda j, i: (j, 0)),   # alpha
                pl.BlockSpec((tile_rows, d), lambda j, i: (j, 0)),   # embedding
                pl.BlockSpec((pl.Squeezed(), tile_rows, d),
                             lambda j, i: (i, j, 0)),                # node feats
            ],
            out_specs=pl.BlockSpec((pl.Squeezed(), tile_rows, d),
                                   lambda j, i: (i, j, 0)),
        ),
        compiler_params=pltpu.CompilerParams(
            dimension_semantics=("parallel", "parallel"),
        ),
    )(alpha, items_embedding, x3)


def _reference(nodes_output, items_embedding, alpha):
    n, d = items_embedding.shape
    b = nodes_output.shape[0] // n
    x = nodes_output.reshape(b, n, d)
    return (1.0 - alpha)[None] * items_embedding[None] + alpha[None] * x


if __name__ == "__main__":
    key = jax.random.PRNGKey(0)
    k1, k2, k3 = jax.random.split(key, 3)

    items_total = 16      # N (multiple of 8 -> tiled row path)
    embed_dim = 128       # D (lane-aligned)
    batch_size = 2

    # "Parameters": embedding table + alpha (torch.rand -> U[0,1)).
    items_embedding = jax.random.normal(k1, (items_total, embed_dim), dtype=jnp.float32)
    alpha = jax.random.uniform(k2, (items_total, 1), dtype=jnp.float32)

    # Input: flattened node features for all batches, as in the PyTorch forward.
    nodes_output = jax.random.normal(
        k3, (batch_size * items_total, embed_dim), dtype=jnp.float32
    )

    out = global_gated_updater(nodes_output, items_embedding, alpha)
    out = jax.block_until_ready(out)

    ref = _reference(nodes_output, items_embedding, alpha)
    assert out.shape == (batch_size, items_total, embed_dim)
    assert jnp.allclose(out, ref, atol=1e-5, rtol=1e-5)

    print("KERNEL_OK")
</pallas_src>

<mosaic_0001>
module attributes {stable_mosaic.version = 11 : i64} {
  func.func @_gated_updater_kernel(%arg0: i32, %arg1: i32, %arg2: memref<16x1xf32, #tpu.memory_space<vmem>>, %arg3: memref<16x128xf32, #tpu.memory_space<vmem>>, %arg4: memref<1x16x128xf32, #tpu.memory_space<vmem>>, %arg5: memref<1x16x128xf32, #tpu.memory_space<vmem>>) attributes {dimension_semantics = [#tpu.dimension_semantics<parallel>, #tpu.dimension_semantics<parallel>], iteration_bounds = array<i64: 1, 2>, scalar_prefetch = 0 : i64, scratch_operands = 0 : i64, tpu.core_type = #tpu.core_type<tc>, window_params = [{transform_indices = @transform_0, window_bounds = array<i64: 16, 1>}, {transform_indices = @transform_1, window_bounds = array<i64: 16, 128>}, {transform_indices = @transform_2, window_bounds = array<i64: 1, 16, 128>}, {transform_indices = @transform_3, window_bounds = array<i64: 1, 16, 128>}]} {
    %c0 = arith.constant 0 : index
    %c0_0 = arith.constant 0 : index
    %0 = vector.load %arg2[%c0, %c0_0] : memref<16x1xf32, #tpu.memory_space<vmem>>, vector<16x1xf32>
    %c0_1 = arith.constant 0 : index
    %c0_2 = arith.constant 0 : index
    %1 = vector.load %arg3[%c0_1, %c0_2] : memref<16x128xf32, #tpu.memory_space<vmem>>, vector<16x128xf32>
    %c0_3 = arith.constant 0 : index
    %c0_4 = arith.constant 0 : index
    %c0_5 = arith.constant 0 : index
    %2 = vector.load %arg4[%c0_3, %c0_4, %c0_5] : memref<1x16x128xf32, #tpu.memory_space<vmem>>, vector<1x16x128xf32>
    %3 = vector.shape_cast %2 : vector<1x16x128xf32> to vector<16x128xf32>
    %4 = arith.subf %3, %1 : vector<16x128xf32>
    %5 = vector.broadcast %0 : vector<16x1xf32> to vector<16x128xf32>
    %6 = arith.mulf %5, %4 : vector<16x128xf32>
    %7 = arith.addf %1, %6 : vector<16x128xf32>
    %c0_6 = arith.constant 0 : index
    %c0_7 = arith.constant 0 : index
    %c0_8 = arith.constant 0 : index
    %8 = vector.load %arg5[%c0_6, %c0_7, %c0_8] : memref<1x16x128xf32, #tpu.memory_space<vmem>>, vector<1x16x128xf32>
    %9 = vector.shape_cast %8 : vector<1x16x128xf32> to vector<16x128xf32>
    %10 = vector.shape_cast %7 : vector<16x128xf32> to vector<1x16x128xf32>
    tpu.vector_store %arg5[%c0_6, %c0_7, %c0_8], %10 {strides = array<i32>} : memref<1x16x128xf32, #tpu.memory_space<vmem>>, vector<1x16x128xf32>,
    return
  }
  func.func @transform_0(%arg0: i32, %arg1: i32) -> (i32, i32) {
    %c0_i32 = arith.constant 0 : i32
    %c0_i32_0 = arith.constant 0 : i32
    return %arg0, %c0_i32 : i32, i32
  }
  func.func @transform_1(%arg0: i32, %arg1: i32) -> (i32, i32) {
    %c0_i32 = arith.constant 0 : i32
    %c0_i32_0 = arith.constant 0 : i32
    return %arg0, %c0_i32 : i32, i32
  }
  func.func @transform_2(%arg0: i32, %arg1: i32) -> (i32, i32, i32) {
    %c0_i32 = arith.constant 0 : i32
    %c0_i32_0 = arith.constant 0 : i32
    return %arg1, %arg0, %c0_i32 : i32, i32, i32
  }
  func.func @transform_3(%arg0: i32, %arg1: i32) -> (i32, i32, i32) {
    %c0_i32 = arith.constant 0 : i32
    %c0_i32_0 = arith.constant 0 : i32
    return %arg1, %arg0, %c0_i32 : i32, i32, i32
  }
}

</mosaic_0001>

<llo_original>
// kernel: tpu_custom_call.1
$region0: #{tpu_custom_call.1}
  #allocation0 [shape = 'u32[]', space=smem, size = 0x4, offset = 0x4, fixed_abs, tag = 'smem constant byte address 0x4 - core index']
  #allocation1 [shape = 'u32[72,128]{1,0:T(1,128)}', space=vmem, size = 0x9000, scoped, tag = 'internal scratch']
  %s0 = inlined_call_operand.vmem [shape: f32[16,1], index: 0, kind: input, shape index: {}]
  %s1 = inlined_call_operand.vmem [shape: f32[16,128], index: 1, kind: input, shape index: {}]
  %s2 = inlined_call_operand.hbm [shape: f32[2,16,128], index: 2, kind: input, shape index: {}]
  %s3 = inlined_call_operand.hbm [shape: f32[2,16,128], index: 3, kind: output, shape index: {}]
  %s4 = sld [smem:[#allocation0]]
  $region49: #{tpu_custom_call.1} parent=0
    _
  %s6 = ssub.s32 1, %s4
  %s7 = scalar_select 0, %s6, %s4
  $region1: #{tpu_custom_call.1} parent=0
    #allocation2 [shape = 'u8[16384]{0}', space=vmem, size = 0x4000, scoped, tag = 'input window, operand 2']
    #allocation3 [shape = 's32[2]{0}', space=sflag, size = 0x8, scoped, tag = 'scoped memory for tpu_custom_call.1']
    #allocation4 [shape = 's32[2]{0}', space=sflag, size = 0x8, scoped, tag = 'scoped memory for tpu_custom_call.1']
    #allocation5 [shape = 'u8[16384]{0}', space=vmem, size = 0x4000, scoped, tag = 'output window, operand 0']
    %8 = vsyncpa [#allocation3], 0
    %s9 = scalar_lea.sflag [#allocation3], 1
    %10 = vsyncpa %s9, 0
    %11 = vsyncpa [#allocation4], 0
    %s12 = scalar_lea.sflag [#allocation4], 1
    %13 = vsyncpa %s12, 0
    loop: start=0, step=1, limit=4
    $region2: #{tpu_custom_call.1} parent=1 // loop_pre_header
      _
    $region3: #{tpu_custom_call.1} parent=1 // loop_header
      %s15 = sphi 0, %s19
      %p16 = scmp.ge.s32.totalorder %s15, 4
      %s22 = sphi 0, %s34
      %s23 = sphi 0, %s30
      %s24 = sphi 0, %s22
      %s25 = sphi 0, %s23
      %s26 = sphi 0, %s24
      %s27 = sphi 0, %s25
      %s37 = sphi 0, %s39
      %s40 = sphi 0, %s37
      %s41 = sphi 0, %s40
      %s57 = sphi 0, %s41
      %s63 = sphi 0, %s65
      %s66 = sphi 0, %s63
      %s67 = sphi 0, %s66
      %s83 = sphi 0, %s67
      %s91 = sphi 0, %s93
      %s94 = sphi 0, %s91
      %s95 = sphi 0, %s94
      %s111 = sphi 0, %s95
      %s119 = sphi 0, %s121
      %s122 = sphi 0, %s119
      %s123 = sphi 0, %s122
      %s139 = sphi 0, %s123
    $region4: #{tpu_custom_call.1} parent=1 // loop_header_branch
      %18 = sbr.rel (%p16) target = $region8
    $region5: #{tpu_custom_call.1} parent=1 // loop_body
      %s20 = ssub.s32 %s15, 1
      %s21 = ssub.s32 %s15, 2
      %s28 = sadd.s32 1, %s23
      %p29 = scmp.ge.s32.totalorder %s28, 2
      %s30 = scalar_select %p29, 0, %s28
      %s31 = sadd.s32 1, %s22
      %s32 = scalar_select %p29, %s31, %s22
      %p33 = scmp.ge.s32.totalorder %s32, 1
      %s34 = scalar_select %p33, 0, %s32
      %s35 = ssub.s32 %s22, %s34
      %p36 = scmp.eq.s32.totalorder %s35, 0
      %s38 = sadd.s32 %s37, 1
      %s39 = scalar_select %p36, %s37, %s38
      %p42 = pneg %p36
      %p43 = scmp.eq.s32.totalorder %s15, 1
      %p44 = por %p42, %p43
      %p45 = scmp.ne.s32.totalorder %s37, %s40
      %p46 = scmp.eq.s32.totalorder %s15, 0
      %p47 = por %p45, %p46
      %p48 = scmp.ne.s32.totalorder %s37, %s40
      %p49 = scmp.eq.s32.totalorder %s20, 1
      %p50 = por %p48, %p49
      %p51 = scmp.ne.s32.totalorder %s40, %s41
      %p52 = scmp.eq.s32.totalorder %s20, 0
      %p53 = por %p51, %p52
      %p54 = scmp.ne.s32.totalorder %s40, %s41
      %p55 = scmp.eq.s32.totalorder %s21, 1
      %p56 = por %p54, %p55
      %p58 = scmp.ne.s32.totalorder %s41, %s57
      %p59 = scmp.eq.s32.totalorder %s21, 0
      %p60 = por %p58, %p59
      %s61 = ssub.s32 %s22, %s34
      %p62 = scmp.eq.s32.totalorder %s61, 0
      %s64 = sadd.s32 %s63, 1
      %s65 = scalar_select %p62, %s63, %s64
      %p68 = pneg %p62
      %p69 = scmp.eq.s32.totalorder %s15, 1
      %p70 = por %p68, %p69
      %p71 = scmp.ne.s32.totalorder %s63, %s66
      %p72 = scmp.eq.s32.totalorder %s15, 0
      %p73 = por %p71, %p72
      %p74 = scmp.ne.s32.totalorder %s63, %s66
      %p75 = scmp.eq.s32.totalorder %s20, 1
      %p76 = por %p74, %p75
      %p77 = scmp.ne.s32.totalorder %s66, %s67
      %p78 = scmp.eq.s32.totalorder %s20, 0
      %p79 = por %p77, %p78
      %p80 = scmp.ne.s32.totalorder %s66, %s67
      %p81 = scmp.eq.s32.totalorder %s21, 1
      %p82 = por %p80, %p81
      %p84 = scmp.ne.s32.totalorder %s67, %s83
      %p85 = scmp.eq.s32.totalorder %s21, 0
      %p86 = por %p84, %p85
      %s87 = ssub.s32 %s23, %s30
      %s88 = ssub.s32 %s22, %s34
      %s89 = sor.u32 %s87, %s88
      %p90 = scmp.eq.s32.totalorder %s89, 0
      %s92 = sadd.s32 %s91, 1
      %s93 = scalar_select %p90, %s91, %s92
      %p96 = pneg %p90
      %p97 = scmp.eq.s32.totalorder %s15, 1
      %p98 = por %p96, %p97
      %p99 = scmp.ne.s32.totalorder %s91, %s94
      %p100 = scmp.eq.s32.totalorder %s15, 0
      %p101 = por %p99, %p100
      %p102 = scmp.ne.s32.totalorder %s91, %s94
      %p103 = scmp.eq.s32.totalorder %s20, 1
      %p104 = por %p102, %p103
      %p105 = scmp.ne.s32.totalorder %s94, %s95
      %p106 = scmp.eq.s32.totalorder %s20, 0
      %p107 = por %p105, %p106
      %p108 = scmp.ne.s32.totalorder %s94, %s95
      %p109 = scmp.eq.s32.totalorder %s21, 1
      %p110 = por %p108, %p109
      %p112 = scmp.ne.s32.totalorder %s95, %s111
      %p113 = scmp.eq.s32.totalorder %s21, 0
      %p114 = por %p112, %p113
      %s115 = ssub.s32 %s23, %s30
      %s116 = ssub.s32 %s22, %s34
      %s117 = sor.u32 %s115, %s116
      %p118 = scmp.eq.s32.totalorder %s117, 0
      %s120 = sadd.s32 %s119, 1
      %s121 = scalar_select %p118, %s119, %s120
      %p124 = pneg %p118
      %p125 = scmp.eq.s32.totalorder %s15, 1
      %p126 = por %p124, %p125
      %p127 = scmp.ne.s32.totalorder %s119, %s122
      %p128 = scmp.eq.s32.totalorder %s15, 0
      %p129 = por %p127, %p128
      %p130 = scmp.ne.s32.totalorder %s119, %s122
      %p131 = scmp.eq.s32.totalorder %s20, 1
      %p132 = por %p130, %p131
      %p133 = scmp.ne.s32.totalorder %s122, %s123
      %p134 = scmp.eq.s32.totalorder %s20, 0
      %p135 = por %p133, %p134
      %p136 = scmp.ne.s32.totalorder %s122, %s123
      %p137 = scmp.eq.s32.totalorder %s21, 1
      %p138 = por %p136, %p137
      %p140 = scmp.ne.s32.totalorder %s123, %s139
      %p141 = scmp.eq.s32.totalorder %s21, 0
      %p142 = por %p140, %p141
      %p143 = scmp.le.s32.totalorder 1, %s15
      %p144 = scmp.lt.s32.totalorder %s15, 3
      %p145 = pnand %p143, %p144
      %p146 = pneg %p145
      // Predicated region
      $region9: #{tpu_custom_call.1} parent=5 // pred_check
        _
      $region10: #{tpu_custom_call.1} parent=5 // pred_check_branch
        %148 = sbr.rel (%p145) target = $region12
      $region11: #{tpu_custom_call.1} parent=5 // pred_region
        %s149 = ssub.s32 %s15, 1
        // Predicated region
        $region13: #{tpu_custom_call.1} parent=11 // pred_check
          %p150 = pneg %p53
        $region14: #{tpu_custom_call.1} parent=11 // pred_check_branch
          %152 = sbr.rel (%p150) target = $region16
        $region15: #{tpu_custom_call.1} parent=11 // pred_region
          %s153 = smul.u32 2, %s24
          %p154 = scmp.lt.s32.totalorder %s153, 1
          %s155 = scalar_select %p154, %s153, 1
          %s156 = smul.addr %s155, 8
          %s157 = scalar_lea.vmem %s0, %s156
          %s158 = smul.u32 2, %s24
        $region16: #{tpu_custom_call.1} parent=11 // pred_fallthru
          _
        // Predicated region
        $region17: #{tpu_custom_call.1} parent=11 // pred_check
          %p159 = pneg %p79
        $region18: #{tpu_custom_call.1} parent=11 // pred_check_branch
          %161 = sbr.rel (%p159) target = $region20
        $region19: #{tpu_custom_call.1} parent=11 // pred_region
          %s162 = smul.u32 2, %s24
          %p163 = scmp.lt.s32.totalorder %s162, 1
          %s164 = scalar_select %p163, %s162, 1
          %s165 = smul.addr %s164, 8
          %s166 = scalar_lea.vmem %s1, %s165
          %s167 = smul.u32 2, %s24
        $region20: #{tpu_custom_call.1} parent=11 // pred_fallthru
          _
      $region12: #{tpu_custom_call.1} parent=5 // pred_fallthru
        _
      %p168 = scmp.lt.s32.totalorder %s15, 2
      // Predicated region
      $region21: #{tpu_custom_call.1} parent=5 // pred_check
        %p169 = pneg %p168
      $region22: #{tpu_custom_call.1} parent=5 // pred_check_branch
        %171 = sbr.rel (%p169) target = $region24
      $region23: #{tpu_custom_call.1} parent=5 // pred_region
        // Predicated region
        $region25: #{tpu_custom_call.1} parent=23 // pred_check
          %p172 = pneg %p101
        $region26: #{tpu_custom_call.1} parent=23 // pred_check_branch
          %174 = sbr.rel (%p172) target = $region28
        $region27: #{tpu_custom_call.1} parent=23 // pred_region
          %s175 = sand.u32 %s91, 1
          %s176 = scalar_lea.sflag [#allocation3], %s175
          %s177 = sand.u32 %s91, 1
          %s178 = smul.addr %s177, 16
          %s179 = scalar_lea.vmem [#allocation2], %s178
          %s180 = smul.u32 2, %s22
          %182 = vsyncadd %s176, 0
          %s183 = smul.addr %s23, 2
          %s184 = sadd.s32 %s180, %s183
          %s185 = smul.addr %s184, 8
          %s186 = scalar_lea.hbm %s2, %s185
          %s187 = sshll.u32 %s186, 4
          %s188 = int_to_ptr.hbm [resolvable:$true] %s187
          %s189 = sshll.u32 %s179, 4
          %s190 = int_to_ptr.vmem [resolvable:$true] %s189
          %195 = dma.hbm_to_vmem [thread:$0]  %s188, 256, %s190, %s176, 128, 128, 8
        $region28: #{tpu_custom_call.1} parent=23 // pred_fallthru
          _
      $region24: #{tpu_custom_call.1} parent=5 // pred_fallthru
        _
      %p196 = scmp.le.s32.totalorder 1, %s15
      %p197 = scmp.lt.s32.totalorder %s15, 3
      %p198 = pnand %p196, %p197
      %p199 = pneg %p198
      // Predicated region
      $region29: #{tpu_custom_call.1} parent=5 // pred_check
        _
      $region30: #{tpu_custom_call.1} parent=5 // pred_check_branch
        %201 = sbr.rel (%p198) target = $region32
      $region31: #{tpu_custom_call.1} parent=5 // pred_region
        %s202 = ssub.s32 %s15, 1
        %s203 = sand.u32 %s94, 1
        %s204 = scalar_lea.sflag [#allocation3], %s203
        %s205 = sand.u32 %s94, 1
        %s206 = smul.addr %s205, 16
        %s207 = scalar_lea.vmem [#allocation2], %s206
        // Predicated region
        $region33: #{tpu_custom_call.1} parent=31 // pred_check
          %p208 = pneg %p107
        $region34: #{tpu_custom_call.1} parent=31 // pred_check_branch
          %210 = sbr.rel (%p208) target = $region36
        $region35: #{tpu_custom_call.1} parent=31 // pred_region
          %212 = dma.done %s204, 256
        $region36: #{tpu_custom_call.1} parent=31 // pred_fallthru
          _
        %s213 = smul.u32 2, %s24
        %p214 = scmp.lt.s32.totalorder %s213, 1
        %s215 = scalar_select %p214, %s213, 1
        %s216 = smul.addr %s215, 8
        %s217 = scalar_lea.vmem %s0, %s216
        %p218 = pneg %p53
        %p219 = pneg %p50
        %s220 = smul.u32 2, %s24
        %p221 = scmp.lt.s32.totalorder %s220, 1
        %s222 = scalar_select %p221, %s220, 1
        %s223 = smul.addr %s222, 8
        %s224 = scalar_lea.vmem %s1, %s223
        %p225 = pneg %p79
        %p226 = pneg %p76
        %s227 = sand.u32 %s94, 1
        %s228 = scalar_lea.sflag [#allocation3], %s227
        %s229 = sand.u32 %s94, 1
        %s230 = smul.addr %s229, 16
        %s231 = scalar_lea.vmem [#allocation2], %s230
        %p232 = pneg %p107
        %p233 = pneg %p104
        %p234 = pneg %p135
        %p235 = pneg %p132
        %s236 = sand.u32 %s122, 1
        %s237 = scalar_lea.sflag [#allocation4], %s236
        %s238 = sand.u32 %s122, 1
        %s239 = smul.addr %s238, 16
        %s240 = scalar_lea.vmem [#allocation5], %s239
        %s241 = smul.u32 2, %s24
        %p242 = scmp.lt.s32.totalorder %s241, 1
        %s243 = scalar_select %p242, %s241, 1
        %s244 = smul.addr %s243, 8
        %s245 = scalar_lea.vmem %s0, %s244
        %s246 = smul.u32 2, %s24
        %s247 = smul.u32 2, %s24
        %p248 = scmp.lt.s32.totalorder %s247, 1
        %s249 = scalar_select %p248, %s247, 1
        %s250 = smul.addr %s249, 8
        %s251 = scalar_lea.vmem %s1, %s250
        %s252 = smul.u32 2, %s24
        %s253 = smul.u32 2, %s24
        %s254 = smul.u32 2, %s24
        %v255 = vld [vmem:[%s245] sm:$0xff]
        %v256 = vld [vmem:[%s245 + $0x8] sm:$0xff]
        %v257 = vld [vmem:[%s251] sm:$0xff]
        %v258 = vld [vmem:[%s251 + $0x8] sm:$0xff]
        %v259 = vld [vmem:[%s207] sm:$0xff]
        %v260 = vld [vmem:[%s207 + $0x8] sm:$0xff]
        %v261 = vsub.f32 %v259, %v257
        %v262 = vsub.f32 %v260, %v258
        %264 = vset.pattern.permute.xlu0 0
        %265 = vperm.xlu0 %264, %v255
        %v266 = vpop.permute.xlu0 %265
        %269 = vset.pattern.permute.xlu0 0
        %270 = vperm.xlu0 %269, %v256
        %v271 = vpop.permute.xlu0 %270
        %v273 = vmul.f32 %v266, %v261
        %v274 = vmul.f32 %v271, %v262
        %v275 = vadd.f32 %v257, %v273
        %v276 = vadd.f32 %v258, %v274
        %277 = vst [vmem:[%s240] sm:$0xff] %v275
        %278 = vst [vmem:[%s240 + $0x8] sm:$0xff] %v276
        %s279 = sand.u32 %s122, 1
        %s280 = scalar_lea.sflag [#allocation4], %s279
        %s281 = sand.u32 %s122, 1
        %s282 = smul.addr %s281, 16
        %s283 = scalar_lea.vmem [#allocation5], %s282
        // Predicated region
        $region37: #{tpu_custom_call.1} parent=31 // pred_check
          %p284 = pneg %p132
        $region38: #{tpu_custom_call.1} parent=31 // pred_check_branch
          %286 = sbr.rel (%p284) target = $region40
        $region39: #{tpu_custom_call.1} parent=31 // pred_region
          %s287 = smul.u32 2, %s24
          %289 = vsyncadd %s280, 0
          %s290 = smul.addr %s25, 2
          %s291 = sadd.s32 %s287, %s290
          %s292 = smul.addr %s291, 8
          %s293 = scalar_lea.hbm %s3, %s292
          %s294 = sshll.u32 %s283, 4
          %s295 = int_to_ptr.vmem [resolvable:$true] %s294
          %s296 = sshll.u32 %s293, 4
          %s297 = int_to_ptr.hbm [resolvable:$true] %s296
          %302 = dma.vmem_to_hbm [thread:$0]  %s295, 256, %s297, %s280, 128, 128, 8
        $region40: #{tpu_custom_call.1} parent=31 // pred_fallthru
          _
      $region32: #{tpu_custom_call.1} parent=5 // pred_fallthru
        _
      %p303 = scmp.le.s32.totalorder 2, %s15
      // Predicated region
      $region41: #{tpu_custom_call.1} parent=5 // pred_check
        %p304 = pneg %p303
      $region42: #{tpu_custom_call.1} parent=5 // pred_check_branch
        %306 = sbr.rel (%p304) target = $region44
      $region43: #{tpu_custom_call.1} parent=5 // pred_region
        %s307 = ssub.s32 %s15, 2
        // Predicated region
        $region45: #{tpu_custom_call.1} parent=43 // pred_check
          %p308 = pneg %p138
        $region46: #{tpu_custom_call.1} parent=43 // pred_check_branch
          %310 = sbr.rel (%p308) target = $region48
        $region47: #{tpu_custom_call.1} parent=43 // pred_region
          %s311 = sand.u32 %s123, 1
          %s312 = scalar_lea.sflag [#allocation4], %s311
          %s313 = sand.u32 %s123, 1
          %s314 = smul.addr %s313, 16
          %s315 = scalar_lea.vmem [#allocation5], %s314
          %317 = dma.done %s312, 256
        $region48: #{tpu_custom_call.1} parent=43 // pred_fallthru
          _
      $region44: #{tpu_custom_call.1} parent=5 // pred_fallthru
        _
    $region6: #{tpu_custom_call.1} parent=1 // loop_footer
      %s19 = sadd.s32 1, %s15
    $region7: #{tpu_custom_call.1} parent=1 // loop_footer_branch
      %14 = sbr.rel target = $region3
    $region8: #{tpu_custom_call.1} parent=1 // loop_exit
      _
    %318 = vsyncpa [#allocation3], 1
    %s319 = scalar_lea.sflag [#allocation3], 1
    %320 = vsyncpa %s319, 1
    %321 = vsyncpa [#allocation4], 1
    %s322 = scalar_lea.sflag [#allocation4], 1
    %323 = vsyncpa %s322, 1

</llo_original>
